<compile_context>
chip_gen: v7x
topology: tpu7x:2x2x1
jax: 0.10.0
libtpu: 0.0.40
codegen_flags: <defaults>
</compile_context>

<pallas_src>
import functools

import jax
import jax.numpy as jnp
from jax.experimental import pallas as pl
from jax.experimental.pallas import tpu as pltpu


# Per-block VMEM budget for the big (batch, C, HW) slabs.  With input + output
# double-buffered this is ~4x this number of live VMEM, well under the scoped
# limit below on every TPU generation.
_BLOCK_BUDGET_BYTES = 2 * 1024 * 1024
_VMEM_LIMIT_BYTES = 32 * 1024 * 1024


def _exact_gelu(x):
    # PyTorch nn.GELU() default is the exact erf-based GELU.
    return x * 0.5 * (1.0 + jax.lax.erf(x * (1.0 / jnp.sqrt(2.0).astype(x.dtype))))


def _gate_from_pooled(pooled, w1, b1, w2, b2):
    """Gate math on the VPU: contraction dims (C, mip) are tiny, so an MXU
    GEMV would run at ~1% utilization; broadcast-multiply + reduce overlaps
    with the load/store slots that actually bound this kernel."""
    # pooled: (B, C), w1: (mip, C), b1: (1, mip), w2: (C, mip), b2: (1, C)
    s1 = jnp.sum(pooled[:, None, :] * w1[None, :, :], axis=-1) + b1          # (B, mip)
    s1 = _exact_gelu(s1)
    s2 = jnp.sum(s1[:, None, :] * w2[None, :, :], axis=-1) + b2              # (B, C)
    return jax.nn.sigmoid(s2)                                                # (B, C)


# ----------------------------------------------------------------------------
# Fused single-pass kernel (whole spatial extent per block).
# ----------------------------------------------------------------------------
def ca_fused_kernel(x_ref, w1_ref, b1_ref, w2_ref, b2_ref, o_ref):
    # x_ref / o_ref: (B_TILE, C, HW)
    # Pool directly from the ref; don't keep the whole slab live across the
    # gate chain (re-read it from VMEM below -> short live ranges, no spills).
    pooled = jnp.mean(x_ref[...].astype(jnp.float32), axis=-1)               # (B, C)
    gate = _gate_from_pooled(pooled, w1_ref[...], b1_ref[...],
                             w2_ref[...], b2_ref[...])                       # (B, C)
    o_ref[...] = x_ref[...] * gate[:, :, None].astype(o_ref.dtype)


# ----------------------------------------------------------------------------
# Two-pass path: pass 1 = spatial-tiled pool + gate, pass 2 = elementwise scale.
# ----------------------------------------------------------------------------
def ca_pool_gate_kernel(x_ref, w1_ref, b1_ref, w2_ref, b2_ref, gate_ref,
                        acc_ref, *, inv_hw):
    j = pl.program_id(0)

    @pl.when(j == 0)
    def _():
        acc_ref[...] = jnp.zeros_like(acc_ref)

    # Partial spatial sum for this tile.
    acc_ref[...] += jnp.sum(x_ref[...].astype(jnp.float32), axis=-1)         # (N, C)

    @pl.when(j == pl.num_programs(0) - 1)
    def _():
        pooled = acc_ref[...] * inv_hw
        gate_ref[...] = _gate_from_pooled(pooled, w1_ref[...], b1_ref[...],
                                          w2_ref[...], b2_ref[...]
                                          ).astype(gate_ref.dtype)


def ca_scale_kernel(x_ref, gate_ref, o_ref):
    # x_ref / o_ref: (N, C, HW_TILE), gate_ref: (N, C)
    o_ref[...] = x_ref[...] * gate_ref[...][:, :, None].astype(o_ref.dtype)


def _choose_hw_tile(hw, n, c, itemsize, budget):
    """Largest lane-dense (multiple-of-128) spatial tile that divides hw and
    keeps the (n, c, hw_tile) block under the VMEM budget."""
    max_elems = budget // max(1, n * c * itemsize)
    if hw <= max_elems:
        return hw
    tile = (max_elems // 128) * 128
    while tile >= 128:
        if hw % tile == 0:
            return tile
        tile -= 128
    return hw  # fallback: full spatial extent (always a legal block)


# ----------------------------------------------------------------------------
# Wrapper
# ----------------------------------------------------------------------------
def ca_forward(x, w1, b1, w2, b2, *, force_two_pass=False, hw_tile=None):
    """x: (N, C, H, W). w1: (mip, C), b1: (mip,), w2: (C, mip), b2: (C,)."""
    n, c, h, w = x.shape
    hw = h * w
    mip = w1.shape[0]
    itemsize = x.dtype.itemsize

    x_flat = x.reshape(n, c, hw)
    b1_row = b1.reshape(1, mip).astype(jnp.float32)
    b2_row = b2.reshape(1, c).astype(jnp.float32)
    w1 = w1.astype(jnp.float32)
    w2 = w2.astype(jnp.float32)

    weight_specs = [
        pl.BlockSpec((mip, c), lambda *_: (0, 0)),    # w1
        pl.BlockSpec((1, mip), lambda *_: (0, 0)),    # b1
        pl.BlockSpec((c, mip), lambda *_: (0, 0)),    # w2
        pl.BlockSpec((1, c), lambda *_: (0, 0)),      # b2
    ]

    per_sample_bytes = c * hw * itemsize
    use_fused = (not force_two_pass) and (per_sample_bytes <= _BLOCK_BUDGET_BYTES)

    if use_fused:
        # Batch several samples per grid step so the per-step (~0.35 us)
        # overhead is amortized and pooling / gate math is batched.
        b_tile = max(1, min(n, _BLOCK_BUDGET_BYTES // per_sample_bytes))
        grid = (pl.cdiv(n, b_tile),)

        out_flat = pl.pallas_call(
            ca_fused_kernel,
            out_shape=jax.ShapeDtypeStruct((n, c, hw), x.dtype),
            grid_spec=pltpu.PrefetchScalarGridSpec(
                num_scalar_prefetch=0,
                grid=grid,
                in_specs=[pl.BlockSpec((b_tile, c, hw), lambda i: (i, 0, 0))]
                + weight_specs,
                out_specs=pl.BlockSpec((b_tile, c, hw), lambda i: (i, 0, 0)),
            ),
            compiler_params=pltpu.CompilerParams(
                dimension_semantics=("parallel",),
                vmem_limit_bytes=_VMEM_LIMIT_BYTES),
        )(x_flat, w1, b1_row, w2, b2_row)
        return out_flat.reshape(n, c, h, w)

    # ---- two-pass path (large H*W or forced for testing) ----
    if hw_tile is None:
        hw_tile = _choose_hw_tile(hw, n, c, itemsize, _BLOCK_BUDGET_BYTES)
    n_spatial = pl.cdiv(hw, hw_tile)

    # Pass 1: accumulate spatial sums over an "arbitrary" spatial grid axis,
    # emit the (N, C) gate at the last step.
    gate = pl.pallas_call(
        functools.partial(ca_pool_gate_kernel, inv_hw=float(1.0 / hw)),
        out_shape=jax.ShapeDtypeStruct((n, c), jnp.float32),
        grid_spec=pltpu.PrefetchScalarGridSpec(
            num_scalar_prefetch=0,
            grid=(n_spatial,),
            in_specs=[pl.BlockSpec((n, c, hw_tile), lambda j: (0, 0, j))]
            + weight_specs,
            out_specs=pl.BlockSpec((n, c), lambda j: (0, 0)),
            scratch_shapes=[pltpu.VMEM((n, c), jnp.float32)],
        ),
        compiler_params=pltpu.CompilerParams(
            dimension_semantics=("arbitrary",),
            vmem_limit_bytes=_VMEM_LIMIT_BYTES),
    )(x_flat, w1, b1_row, w2, b2_row)

    # Pass 2: embarrassingly-parallel, lane-dense elementwise scale.
    out_flat = pl.pallas_call(
        ca_scale_kernel,
        out_shape=jax.ShapeDtypeStruct((n, c, hw), x.dtype),
        grid_spec=pltpu.PrefetchScalarGridSpec(
            num_scalar_prefetch=0,
            grid=(n_spatial,),
            in_specs=[
                pl.BlockSpec((n, c, hw_tile), lambda j: (0, 0, j)),
                pl.BlockSpec((n, c), lambda j: (0, 0)),
            ],
            out_specs=pl.BlockSpec((n, c, hw_tile), lambda j: (0, 0, j)),
        ),
        compiler_params=pltpu.CompilerParams(
            dimension_semantics=("parallel",),
            vmem_limit_bytes=_VMEM_LIMIT_BYTES),
    )(x_flat, gate)

    return out_flat.reshape(n, c, h, w)


def ca_reference(x, w1, b1, w2, b2):
    """Pure-JAX reference matching the PyTorch forward."""
    pooled = jnp.mean(x, axis=(2, 3), keepdims=True)                         # (N,C,1,1)
    s1 = jnp.einsum('oc,ncij->noij', w1, pooled) + b1[None, :, None, None]
    s1 = _exact_gelu(s1)
    s2 = jnp.einsum('om,nmij->noij', w2, s1) + b2[None, :, None, None]
    return x * jax.nn.sigmoid(s2)


if __name__ == "__main__":
    # Module config: dim=4, reduction=16 -> mip = max(8, 4 // 16) = 8
    dim = 4
    reduction = 16
    mip = max(8, dim // reduction)

    N, C, H, W = 2, dim, 16, 16

    key = jax.random.PRNGKey(0)
    kx, k1, k2, k3, k4 = jax.random.split(key, 5)

    x = jax.random.normal(kx, (N, C, H, W), dtype=jnp.float32)

    # 1x1 conv weights squeezed to 2-D matrices (conv.weight[:, :, 0, 0]).
    w1 = jax.random.normal(k1, (mip, dim), dtype=jnp.float32) * 0.1
    b1 = jax.random.normal(k2, (mip,), dtype=jnp.float32) * 0.1
    w2 = jax.random.normal(k3, (dim, mip), dtype=jnp.float32) * 0.1
    b2 = jax.random.normal(k4, (dim,), dtype=jnp.float32) * 0.1

    ref = ca_reference(x, w1, b1, w2, b2)

    # Fused single-pass path (the one taken for this config).
    out = jax.block_until_ready(ca_forward(x, w1, b1, w2, b2))
    assert out.shape == (N, C, H, W)
    assert jnp.allclose(out, ref, atol=1e-5, rtol=1e-5), "fused path mismatch"

    # Two-pass path, with the spatial axis split into 128-lane tiles, to
    # exercise the large-H*W structure as well.
    out2 = jax.block_until_ready(
        ca_forward(x, w1, b1, w2, b2, force_two_pass=True, hw_tile=128))
    assert jnp.allclose(out2, ref, atol=1e-5, rtol=1e-5), "two-pass path mismatch"

    print("KERNEL_OK")
</pallas_src>

<mosaic_0001>
module attributes {stable_mosaic.version = 11 : i64} {
  func.func @ca_fused_kernel(%arg0: i32, %arg1: memref<2x4x256xf32, #tpu.memory_space<vmem>>, %arg2: memref<8x4xf32, #tpu.memory_space<vmem>>, %arg3: memref<1x8xf32, #tpu.memory_space<vmem>>, %arg4: memref<4x8xf32, #tpu.memory_space<vmem>>, %arg5: memref<1x4xf32, #tpu.memory_space<vmem>>, %arg6: memref<2x4x256xf32, #tpu.memory_space<vmem>>) attributes {dimension_semantics = [#tpu.dimension_semantics<parallel>], iteration_bounds = array<i64: 1>, scalar_prefetch = 0 : i64, scratch_operands = 0 : i64, tpu.core_type = #tpu.core_type<tc>, window_params = [{transform_indices = @transform_0, window_bounds = array<i64: 2, 4, 256>}, {pipeline_mode = #tpu.pipeline_mode<synchronous>, transform_indices = @transform_1, window_bounds = array<i64: 8, 4>}, {pipeline_mode = #tpu.pipeline_mode<synchronous>, transform_indices = @transform_2, window_bounds = array<i64: 1, 8>}, {pipeline_mode = #tpu.pipeline_mode<synchronous>, transform_indices = @transform_3, window_bounds = array<i64: 4, 8>}, {pipeline_mode = #tpu.pipeline_mode<synchronous>, transform_indices = @transform_4, window_bounds = array<i64: 1, 4>}, {transform_indices = @transform_5, window_bounds = array<i64: 2, 4, 256>}]} {
    %c0 = arith.constant 0 : index
    %c0_0 = arith.constant 0 : index
    %c0_1 = arith.constant 0 : index
    %0 = vector.load %arg1[%c0, %c0_0, %c0_1] : memref<2x4x256xf32, #tpu.memory_space<vmem>>, vector<2x4x256xf32>
    %cst = arith.constant dense<0.000000e+00> : vector<2x4xf32>
    %1 = vector.multi_reduction <add>, %0, %cst [2] : vector<2x4x256xf32> to vector<2x4xf32>
    %cst_2 = arith.constant 2.560000e+02 : f32
    %2 = vector.broadcast %cst_2 : f32 to vector<2x4xf32>
    %3 = arith.divf %1, %2 : vector<2x4xf32>
    %c0_3 = arith.constant 0 : index
    %c0_4 = arith.constant 0 : index
    %4 = vector.load %arg2[%c0_3, %c0_4] : memref<8x4xf32, #tpu.memory_space<vmem>>, vector<8x4xf32>
    %c0_5 = arith.constant 0 : index
    %c0_6 = arith.constant 0 : index
    %5 = vector.load %arg3[%c0_5, %c0_6] : memref<1x8xf32, #tpu.memory_space<vmem>>, vector<1x8xf32>
    %c0_7 = arith.constant 0 : index
    %c0_8 = arith.constant 0 : index
    %6 = vector.load %arg4[%c0_7, %c0_8] : memref<4x8xf32, #tpu.memory_space<vmem>>, vector<4x8xf32>
    %c0_9 = arith.constant 0 : index
    %c0_10 = arith.constant 0 : index
    %7 = vector.load %arg5[%c0_9, %c0_10] : memref<1x4xf32, #tpu.memory_space<vmem>>, vector<1x4xf32>
    %8 = vector.shape_cast %3 : vector<2x4xf32> to vector<2x1x4xf32>
    %9 = vector.shape_cast %4 : vector<8x4xf32> to vector<1x8x4xf32>
    %10 = vector.broadcast %8 : vector<2x1x4xf32> to vector<2x8x4xf32>
    %11 = vector.broadcast %9 : vector<1x8x4xf32> to vector<2x8x4xf32>
    %12 = arith.mulf %10, %11 : vector<2x8x4xf32>
    %cst_11 = arith.constant dense<0.000000e+00> : vector<2x8xf32>
    %13 = vector.multi_reduction <add>, %12, %cst_11 [2] : vector<2x8x4xf32> to vector<2x8xf32>
    %14 = vector.broadcast %5 : vector<1x8xf32> to vector<2x8xf32>
    %15 = arith.addf %13, %14 : vector<2x8xf32>
    %cst_12 = arith.constant 5.000000e-01 : f32
    %16 = vector.broadcast %cst_12 : f32 to vector<2x8xf32>
    %17 = arith.mulf %15, %16 : vector<2x8xf32>
    %cst_13 = arith.constant 2.000000e+00 : f32
    %18 = math.sqrt %cst_13 : f32
    %cst_14 = arith.constant 1.000000e+00 : f32
    %19 = arith.divf %cst_14, %18 : f32
    %20 = vector.broadcast %19 : f32 to vector<2x8xf32>
    %21 = arith.mulf %15, %20 : vector<2x8xf32>
    %22 = math.erf %21 : vector<2x8xf32>
    %cst_15 = arith.constant 1.000000e+00 : f32
    %23 = vector.broadcast %cst_15 : f32 to vector<2x8xf32>
    %24 = arith.addf %23, %22 : vector<2x8xf32>
    %25 = arith.mulf %17, %24 : vector<2x8xf32>
    %26 = vector.shape_cast %25 : vector<2x8xf32> to vector<2x1x8xf32>
    %27 = vector.shape_cast %6 : vector<4x8xf32> to vector<1x4x8xf32>
    %28 = vector.broadcast %26 : vector<2x1x8xf32> to vector<2x4x8xf32>
    %29 = vector.broadcast %27 : vector<1x4x8xf32> to vector<2x4x8xf32>
    %30 = arith.mulf %28, %29 : vector<2x4x8xf32>
    %cst_16 = arith.constant dense<0.000000e+00> : vector<2x4xf32>
    %31 = vector.multi_reduction <add>, %30, %cst_16 [2] : vector<2x4x8xf32> to vector<2x4xf32>
    %32 = vector.broadcast %7 : vector<1x4xf32> to vector<2x4xf32>
    %33 = arith.addf %31, %32 : vector<2x4xf32>
    %34 = arith.negf %33 : vector<2x4xf32>
    %35 = math.exp %34 : vector<2x4xf32>
    %cst_17 = arith.constant 1.000000e+00 : f32
    %36 = vector.broadcast %cst_17 : f32 to vector<2x4xf32>
    %37 = arith.addf %36, %35 : vector<2x4xf32>
    %38 = arith.divf %36, %37 : vector<2x4xf32>
    %c0_18 = arith.constant 0 : index
    %c0_19 = arith.constant 0 : index
    %c0_20 = arith.constant 0 : index
    %39 = vector.load %arg1[%c0_18, %c0_19, %c0_20] : memref<2x4x256xf32, #tpu.memory_space<vmem>>, vector<2x4x256xf32>
    %40 = vector.shape_cast %38 : vector<2x4xf32> to vector<2x4x1xf32>
    %41 = vector.broadcast %40 : vector<2x4x1xf32> to vector<2x4x256xf32>
    %42 = arith.mulf %39, %41 : vector<2x4x256xf32>
    %c0_21 = arith.constant 0 : index
    %c0_22 = arith.constant 0 : index
    %c0_23 = arith.constant 0 : index
    %43 = vector.load %arg6[%c0_21, %c0_22, %c0_23] : memref<2x4x256xf32, #tpu.memory_space<vmem>>, vector<2x4x256xf32>
    tpu.vector_store %arg6[%c0_21, %c0_22, %c0_23], %42 {strides = array<i32>} : memref<2x4x256xf32, #tpu.memory_space<vmem>>, vector<2x4x256xf32>,
    return
  }
  func.func @transform_0(%arg0: i32) -> (i32, i32, i32) {
    %c0_i32 = arith.constant 0 : i32
    %c0_i32_0 = arith.constant 0 : i32
    %c0_i32_1 = arith.constant 0 : i32
    return %arg0, %c0_i32, %c0_i32_0 : i32, i32, i32
  }
  func.func @transform_1(%arg0: i32) -> (i32, i32) {
    %c0_i32 = arith.constant 0 : i32
    %c0_i32_0 = arith.constant 0 : i32
    %c0_i32_1 = arith.constant 0 : i32
    return %c0_i32, %c0_i32_0 : i32, i32
  }
  func.func @transform_2(%arg0: i32) -> (i32, i32) {
    %c0_i32 = arith.constant 0 : i32
    %c0_i32_0 = arith.constant 0 : i32
    %c0_i32_1 = arith.constant 0 : i32
    return %c0_i32, %c0_i32_0 : i32, i32
  }
  func.func @transform_3(%arg0: i32) -> (i32, i32) {
    %c0_i32 = arith.constant 0 : i32
    %c0_i32_0 = arith.constant 0 : i32
    %c0_i32_1 = arith.constant 0 : i32
    return %c0_i32, %c0_i32_0 : i32, i32
  }
  func.func @transform_4(%arg0: i32) -> (i32, i32) {
    %c0_i32 = arith.constant 0 : i32
    %c0_i32_0 = arith.constant 0 : i32
    %c0_i32_1 = arith.constant 0 : i32
    return %c0_i32, %c0_i32_0 : i32, i32
  }
  func.func @transform_5(%arg0: i32) -> (i32, i32, i32) {
    %c0_i32 = arith.constant 0 : i32
    %c0_i32_0 = arith.constant 0 : i32
    %c0_i32_1 = arith.constant 0 : i32
    return %arg0, %c0_i32, %c0_i32_0 : i32, i32, i32
  }
}

</mosaic_0001>

<llo_original>
// kernel: tpu_custom_call.1
$region0: #{tpu_custom_call.1}
  #allocation0 [shape = 'u32[]', space=smem, size = 0x4, offset = 0x4, fixed_abs, tag = 'smem constant byte address 0x4 - core index']
  #allocation1 [shape = 'u32[144,128]{1,0:T(1,128)}', space=vmem, size = 0x12000, scoped, tag = 'internal scratch']
  %s0 = inlined_call_operand.hbm [shape: f32[2,4,256], index: 0, kind: input, shape index: {}]
  %s1 = inlined_call_operand.vmem [shape: f32[8,4], index: 1, kind: input, shape index: {}]
  %s2 = inlined_call_operand.vmem [shape: f32[1,8], index: 2, kind: input, shape index: {}]
  %s3 = inlined_call_operand.vmem [shape: f32[4,8], index: 3, kind: input, shape index: {}]
  %s4 = inlined_call_operand.vmem [shape: f32[1,4], index: 4, kind: input, shape index: {}]
  %s5 = inlined_call_operand.hbm [shape: f32[2,4,256], index: 5, kind: output, shape index: {}]
  %s6 = sld [smem:[#allocation0]]
  $region34: #{tpu_custom_call.1} parent=0
    _
  %s8 = ssub.s32 1, %s6
  %s9 = scalar_select 0, %s8, %s6
  $region1: #{tpu_custom_call.1} parent=0
    #allocation2 [shape = 'u8[8192]{0}', space=vmem, size = 0x2000, scoped, tag = 'input window, operand 0, single buffered']
    #allocation3 [shape = 's32[1]{0}', space=sflag, size = 0x4, scoped, tag = 'scoped memory for tpu_custom_call.1']
    #allocation4 [shape = 's32[1]{0}', space=sflag, size = 0x4, scoped, tag = 'scoped memory for tpu_custom_call.1']
    #allocation5 [shape = 'u8[8192]{0}', space=vmem, size = 0x2000, scoped, tag = 'output window, operand 0, single buffered']
    %10 = vsyncpa [#allocation3], 0
    %11 = vsyncpa [#allocation4], 0
    // Predicated region
    $region2: #{tpu_custom_call.1} parent=1 // pred_check
      _
    $region3: #{tpu_custom_call.1} parent=1 // pred_check_branch
      %13 = sbr.rel (0) target = $region5
    $region4: #{tpu_custom_call.1} parent=1 // pred_region
      %s15 = ssub.s32 256, 256
      %16 = vsyncadd [#allocation3], %s15
      %s17 = sshll.u32 [#allocation2], 4
      %s18 = int_to_ptr.vmem [resolvable:$true] %s17
      %23 = dma.hbm_to_vmem [thread:$0]  %s0, 256, %s18, [#allocation3], 128, 128, 8
    $region5: #{tpu_custom_call.1} parent=1 // pred_fallthru
      _
    // Predicated region
    $region6: #{tpu_custom_call.1} parent=1 // pred_check
      _
    $region7: #{tpu_custom_call.1} parent=1 // pred_check_branch
      %25 = sbr.rel (0) target = $region9
    $region8: #{tpu_custom_call.1} parent=1 // pred_region
      _
    $region9: #{tpu_custom_call.1} parent=1 // pred_fallthru
      _
    // Predicated region
    $region10: #{tpu_custom_call.1} parent=1 // pred_check
      _
    $region11: #{tpu_custom_call.1} parent=1 // pred_check_branch
      %27 = sbr.rel (0) target = $region13
    $region12: #{tpu_custom_call.1} parent=1 // pred_region
      _
    $region13: #{tpu_custom_call.1} parent=1 // pred_fallthru
      _
    // Predicated region
    $region14: #{tpu_custom_call.1} parent=1 // pred_check
      _
    $region15: #{tpu_custom_call.1} parent=1 // pred_check_branch
      %29 = sbr.rel (0) target = $region17
    $region16: #{tpu_custom_call.1} parent=1 // pred_region
      _
    $region17: #{tpu_custom_call.1} parent=1 // pred_fallthru
      _
    // Predicated region
    $region18: #{tpu_custom_call.1} parent=1 // pred_check
      _
    $region19: #{tpu_custom_call.1} parent=1 // pred_check_branch
      %31 = sbr.rel (0) target = $region21
    $region20: #{tpu_custom_call.1} parent=1 // pred_region
      _
    $region21: #{tpu_custom_call.1} parent=1 // pred_fallthru
      _
    // Predicated region
    $region22: #{tpu_custom_call.1} parent=1 // pred_check
      _
    $region23: #{tpu_custom_call.1} parent=1 // pred_check_branch
      %33 = sbr.rel (0) target = $region25
    $region24: #{tpu_custom_call.1} parent=1 // pred_region
      %34 = dma.done [#allocation3], 256
    $region25: #{tpu_custom_call.1} parent=1 // pred_fallthru
      _
    %v35 = vld [vmem:[#allocation2] sm:$0xff]
    %v36 = vld [vmem:[#allocation2 + $0x8] sm:$0xff]
    %v39 = vcombine.high %v35, %v35
    %v40 = vcombine.high %v36, %v36
    %vm43 = vcmask 1043456
    %v44 = vsel %vm43, %v35, 0.0
    %v45 = vsel %vm43, %v39, 0.0
    %v46 = vadd.f32 %v44, %v45
    %47 = vadd.xlane.f32.xlu0 %v46
    %v48 = vpop.xlane.xlu0 %47
    %v49 = vsel %vm43, %v36, 0.0
    %v50 = vsel %vm43, %v40, 0.0
    %v51 = vadd.f32 %v49, %v50
    %52 = vadd.xlane.f32.xlu0 %v51
    %v53 = vpop.xlane.xlu0 %52
    %v54 = vrcp.pop 256.0
    %v55 = vmul.f32 %v48, %v54
    %v56 = vmul.f32 %v53, %v54
    %v57 = vld [vmem:[%s1] sm:$0xff]
    %v58 = vld [vmem:[%s2] sm:$0x1]
    %v59 = vld [vmem:[%s3] sm:$0xf]
    %v60 = vld [vmem:[%s4] sm:$0x1]
    %v62 = vlaneseq
    %v63 = vshrl.u32 %v62, 7
    %v64 = vsub.s32 0, %v63
    %v65 = vrot.slane %v57, %v64
    %67 = vbcast.lane.b32.xlu0 %v65, 256
    %v68 = vpop.permute.xlu0 %67
    %v69 = vlaneseq
    %v70 = vshrl.u32 %v69, 7
    %v71 = vsub.s32 1, %v70
    %v72 = vrot.slane %v57, %v71
    %74 = vbcast.lane.b32.xlu0 %v72, 256
    %v75 = vpop.permute.xlu0 %74
    %v76 = vlaneseq
    %v77 = vshrl.u32 %v76, 7
    %v78 = vsub.s32 2, %v77
    %v79 = vrot.slane %v57, %v78
    %81 = vbcast.lane.b32.xlu0 %v79, 256
    %v82 = vpop.permute.xlu0 %81
    %v83 = vlaneseq
    %v84 = vshrl.u32 %v83, 7
    %v85 = vsub.s32 3, %v84
    %v86 = vrot.slane %v57, %v85
    %88 = vbcast.lane.b32.xlu0 %v86, 256
    %v89 = vpop.permute.xlu0 %88
    %v90 = vlaneseq
    %v91 = vshrl.u32 %v90, 7
    %v92 = vsub.s32 4, %v91
    %v93 = vrot.slane %v57, %v92
    %95 = vbcast.lane.b32.xlu0 %v93, 256
    %v96 = vpop.permute.xlu0 %95
    %v97 = vlaneseq
    %v98 = vshrl.u32 %v97, 7
    %v99 = vsub.s32 5, %v98
    %v100 = vrot.slane %v57, %v99
    %102 = vbcast.lane.b32.xlu0 %v100, 256
    %v103 = vpop.permute.xlu0 %102
    %v104 = vlaneseq
    %v105 = vshrl.u32 %v104, 7
    %v106 = vsub.s32 6, %v105
    %v107 = vrot.slane %v57, %v106
    %109 = vbcast.lane.b32.xlu0 %v107, 256
    %v110 = vpop.permute.xlu0 %109
    %v111 = vlaneseq
    %v112 = vshrl.u32 %v111, 7
    %v113 = vsub.s32 7, %v112
    %v114 = vrot.slane %v57, %v113
    %116 = vbcast.lane.b32.xlu0 %v114, 256
    %v117 = vpop.permute.xlu0 %116
    %v126 = vmul.f32 %v55, %v68
    %v127 = vmul.f32 %v55, %v75
    %v128 = vmul.f32 %v55, %v82
    %v129 = vmul.f32 %v55, %v89
    %v130 = vmul.f32 %v55, %v96
    %v131 = vmul.f32 %v55, %v103
    %v132 = vmul.f32 %v55, %v110
    %v133 = vmul.f32 %v55, %v117
    %v134 = vmul.f32 %v56, %v68
    %v135 = vmul.f32 %v56, %v75
    %v136 = vmul.f32 %v56, %v82
    %v137 = vmul.f32 %v56, %v89
    %v138 = vmul.f32 %v56, %v96
    %v139 = vmul.f32 %v56, %v103
    %v140 = vmul.f32 %v56, %v110
    %v141 = vmul.f32 %v56, %v117
    %158 = vset.pattern.permute.xlu0 0
    %159 = vperm.xlu0 %158, %v126
    %v160 = vpop.permute.xlu0 %159
    %161 = vset.pattern.permute.xlu0 0
    %162 = vperm.xlu0 %161, %v127
    %v163 = vpop.permute.xlu0 %162
    %164 = vset.pattern.permute.xlu0 0
    %165 = vperm.xlu0 %164, %v128
    %v166 = vpop.permute.xlu0 %165
    %167 = vset.pattern.permute.xlu0 0
    %168 = vperm.xlu0 %167, %v129
    %v169 = vpop.permute.xlu0 %168
    %170 = vset.pattern.permute.xlu0 0
    %171 = vperm.xlu0 %170, %v130
    %v172 = vpop.permute.xlu0 %171
    %173 = vset.pattern.permute.xlu0 0
    %174 = vperm.xlu0 %173, %v131
    %v175 = vpop.permute.xlu0 %174
    %176 = vset.pattern.permute.xlu0 0
    %177 = vperm.xlu0 %176, %v132
    %v178 = vpop.permute.xlu0 %177
    %179 = vset.pattern.permute.xlu0 0
    %180 = vperm.xlu0 %179, %v133
    %v181 = vpop.permute.xlu0 %180
    %182 = vset.pattern.permute.xlu0 0
    %183 = vperm.xlu0 %182, %v134
    %v184 = vpop.permute.xlu0 %183
    %185 = vset.pattern.permute.xlu0 0
    %186 = vperm.xlu0 %185, %v135
    %v187 = vpop.permute.xlu0 %186
    %188 = vset.pattern.permute.xlu0 0
    %189 = vperm.xlu0 %188, %v136
    %v190 = vpop.permute.xlu0 %189
    %191 = vset.pattern.permute.xlu0 0
    %192 = vperm.xlu0 %191, %v137
    %v193 = vpop.permute.xlu0 %192
    %194 = vset.pattern.permute.xlu0 0
    %195 = vperm.xlu0 %194, %v138
    %v196 = vpop.permute.xlu0 %195
    %197 = vset.pattern.permute.xlu0 0
    %198 = vperm.xlu0 %197, %v139
    %v199 = vpop.permute.xlu0 %198
    %200 = vset.pattern.permute.xlu0 0
    %201 = vperm.xlu0 %200, %v140
    %v202 = vpop.permute.xlu0 %201
    %203 = vset.pattern.permute.xlu0 0
    %204 = vperm.xlu0 %203, %v141
    %v205 = vpop.permute.xlu0 %204
    %v206 = vlaneseq
    %v207 = vand.u32 %v206, 127
    %v208 = vlaneseq
    %v209 = vshrl.u32 %v208, 7
    %v210 = vsub.s32 %v207, %v209
    %v211 = vrot.slane %v160, %v210
    %v212 = vlaneseq
    %v213 = vshrl.u32 %v212, 7
    %v214 = vsub.s32 %v207, %v213
    %v215 = vrot.slane %v163, %v214
    %v216 = vlaneseq
    %v217 = vshrl.u32 %v216, 7
    %v218 = vsub.s32 %v207, %v217
    %v219 = vrot.slane %v166, %v218
    %v220 = vlaneseq
    %v221 = vshrl.u32 %v220, 7
    %v222 = vsub.s32 %v207, %v221
    %v223 = vrot.slane %v169, %v222
    %v224 = vlaneseq
    %v225 = vshrl.u32 %v224, 7
    %v226 = vsub.s32 %v207, %v225
    %v227 = vrot.slane %v172, %v226
    %v228 = vlaneseq
    %v229 = vshrl.u32 %v228, 7
    %v230 = vsub.s32 %v207, %v229
    %v231 = vrot.slane %v175, %v230
    %v232 = vlaneseq
    %v233 = vshrl.u32 %v232, 7
    %v234 = vsub.s32 %v207, %v233
    %v235 = vrot.slane %v178, %v234
    %v236 = vlaneseq
    %v237 = vshrl.u32 %v236, 7
    %v238 = vsub.s32 %v207, %v237
    %v239 = vrot.slane %v181, %v238
    %v240 = vlaneseq
    %v241 = vshrl.u32 %v240, 7
    %v242 = vsub.s32 %v207, %v241
    %v243 = vrot.slane %v184, %v242
    %v244 = vlaneseq
    %v245 = vshrl.u32 %v244, 7
    %v246 = vsub.s32 %v207, %v245
    %v247 = vrot.slane %v187, %v246
    %v248 = vlaneseq
    %v249 = vshrl.u32 %v248, 7
    %v250 = vsub.s32 %v207, %v249
    %v251 = vrot.slane %v190, %v250
    %v252 = vlaneseq
    %v253 = vshrl.u32 %v252, 7
    %v254 = vsub.s32 %v207, %v253
    %v255 = vrot.slane %v193, %v254
    %v256 = vlaneseq
    %v257 = vshrl.u32 %v256, 7
    %v258 = vsub.s32 %v207, %v257
    %v259 = vrot.slane %v196, %v258
    %v260 = vlaneseq
    %v261 = vshrl.u32 %v260, 7
    %v262 = vsub.s32 %v207, %v261
    %v263 = vrot.slane %v199, %v262
    %v264 = vlaneseq
    %v265 = vshrl.u32 %v264, 7
    %v266 = vsub.s32 %v207, %v265
    %v267 = vrot.slane %v202, %v266
    %v268 = vlaneseq
    %v269 = vshrl.u32 %v268, 7
    %v270 = vsub.s32 %v207, %v269
    %v271 = vrot.slane %v205, %v270
    %vm272 = vcmask 1041409
    %v273 = vsel %vm272, %v215, %v211
    %vm274 = vcmask 1042434
    %v275 = vsel %vm274, %v219, %v273
    %vm276 = vcmask 1043459
    %v277 = vsel %vm276, %v223, %v275
    %vm278 = vcmask 1044484
    %v279 = vsel %vm278, %v227, %v277
    %vm280 = vcmask 1045509
    %v281 = vsel %vm280, %v231, %v279
    %vm282 = vcmask 1046534
    %v283 = vsel %vm282, %v235, %v281
    %vm284 = vcmask 1047559
    %v285 = vsel %vm284, %v239, %v283
    %v286 = vsel %vm272, %v247, %v243
    %v287 = vsel %vm274, %v251, %v286
    %v288 = vsel %vm276, %v255, %v287
    %v289 = vsel %vm278, %v259, %v288
    %v290 = vsel %vm280, %v263, %v289
    %v291 = vsel %vm282, %v267, %v290
    %v292 = vsel %vm284, %v271, %v291
    %vm295 = vcmask 31744
    %v296 = vsel %vm295, %v285, 0.0
    %297 = vadd.xlane.f32.xlu0 %v296
    %v298 = vpop.xlane.xlu0 %297
    %v299 = vsel %vm295, %v292, 0.0
    %300 = vadd.xlane.f32.xlu0 %v299
    %v301 = vpop.xlane.xlu0 %300
    %v303 = vlaneseq
    %v304 = vshrl.u32 %v303, 7
    %v305 = vsub.s32 0, %v304
    %v306 = vrot.slane %v58, %v305
    %308 = vbcast.lane.b32.xlu0 %v306, 256
    %v309 = vpop.permute.xlu0 %308
    %v311 = vadd.f32 %v298, %v309
    %v312 = vadd.f32 %v301, %v309
    %v313 = vmul.f32 %v311, 0.5
    %v314 = vmul.f32 %v312, 0.5
    %v315 = vmul.f32 %v311, 0.70710677
    %v316 = vmul.f32 %v312, 0.70710677
    %v317 = verf.f32.pop %v315
    %v318 = verf.f32.pop %v316
    %v319 = vadd.f32 %v317, 1.0
    %v320 = vadd.f32 %v318, 1.0
    %v321 = vmul.f32 %v313, %v319
    %v322 = vmul.f32 %v314, %v320
    %v324 = vlaneseq
    %v325 = vshrl.u32 %v324, 7
    %v326 = vsub.s32 0, %v325
    %v327 = vrot.slane %v59, %v326
    %329 = vbcast.lane.b32.xlu0 %v327, 256
    %v330 = vpop.permute.xlu0 %329
    %v331 = vlaneseq
    %v332 = vshrl.u32 %v331, 7
    %v333 = vsub.s32 1, %v332
    %v334 = vrot.slane %v59, %v333
    %336 = vbcast.lane.b32.xlu0 %v334, 256
    %v337 = vpop.permute.xlu0 %336
    %v338 = vlaneseq
    %v339 = vshrl.u32 %v338, 7
    %v340 = vsub.s32 2, %v339
    %v341 = vrot.slane %v59, %v340
    %343 = vbcast.lane.b32.xlu0 %v341, 256
    %v344 = vpop.permute.xlu0 %343
    %v345 = vlaneseq
    %v346 = vshrl.u32 %v345, 7
    %v347 = vsub.s32 3, %v346
    %v348 = vrot.slane %v59, %v347
    %350 = vbcast.lane.b32.xlu0 %v348, 256
    %v351 = vpop.permute.xlu0 %350
    %v356 = vmul.f32 %v321, %v330
    %v357 = vmul.f32 %v321, %v337
    %v358 = vmul.f32 %v321, %v344
    %v359 = vmul.f32 %v321, %v351
    %v360 = vmul.f32 %v322, %v330
    %v361 = vmul.f32 %v322, %v337
    %v362 = vmul.f32 %v322, %v344
    %v363 = vmul.f32 %v322, %v351
    %372 = vset.pattern.permute.xlu0 0
    %373 = vperm.xlu0 %372, %v356
    %v374 = vpop.permute.xlu0 %373
    %375 = vset.pattern.permute.xlu0 0
    %376 = vperm.xlu0 %375, %v357
    %v377 = vpop.permute.xlu0 %376
    %378 = vset.pattern.permute.xlu0 0
    %379 = vperm.xlu0 %378, %v358
    %v380 = vpop.permute.xlu0 %379
    %381 = vset.pattern.permute.xlu0 0
    %382 = vperm.xlu0 %381, %v359
    %v383 = vpop.permute.xlu0 %382
    %384 = vset.pattern.permute.xlu0 0
    %385 = vperm.xlu0 %384, %v360
    %v386 = vpop.permute.xlu0 %385
    %387 = vset.pattern.permute.xlu0 0
    %388 = vperm.xlu0 %387, %v361
    %v389 = vpop.permute.xlu0 %388
    %390 = vset.pattern.permute.xlu0 0
    %391 = vperm.xlu0 %390, %v362
    %v392 = vpop.permute.xlu0 %391
    %393 = vset.pattern.permute.xlu0 0
    %394 = vperm.xlu0 %393, %v363
    %v395 = vpop.permute.xlu0 %394
    %v396 = vlaneseq
    %v397 = vshrl.u32 %v396, 7
    %v398 = vsub.s32 %v207, %v397
    %v399 = vrot.slane %v374, %v398
    %v400 = vlaneseq
    %v401 = vshrl.u32 %v400, 7
    %v402 = vsub.s32 %v207, %v401
    %v403 = vrot.slane %v377, %v402
    %v404 = vlaneseq
    %v405 = vshrl.u32 %v404, 7
    %v406 = vsub.s32 %v207, %v405
    %v407 = vrot.slane %v380, %v406
    %v408 = vlaneseq
    %v409 = vshrl.u32 %v408, 7
    %v410 = vsub.s32 %v207, %v409
    %v411 = vrot.slane %v383, %v410
    %v412 = vlaneseq
    %v413 = vshrl.u32 %v412, 7
    %v414 = vsub.s32 %v207, %v413
    %v415 = vrot.slane %v386, %v414
    %v416 = vlaneseq
    %v417 = vshrl.u32 %v416, 7
    %v418 = vsub.s32 %v207, %v417
    %v419 = vrot.slane %v389, %v418
    %v420 = vlaneseq
    %v421 = vshrl.u32 %v420, 7
    %v422 = vsub.s32 %v207, %v421
    %v423 = vrot.slane %v392, %v422
    %v424 = vlaneseq
    %v425 = vshrl.u32 %v424, 7
    %v426 = vsub.s32 %v207, %v425
    %v427 = vrot.slane %v395, %v426
    %v428 = vsel %vm272, %v403, %v399
    %v429 = vsel %vm274, %v407, %v428
    %v430 = vsel %vm276, %v411, %v429
    %v431 = vsel %vm272, %v419, %v415
    %v432 = vsel %vm274, %v423, %v431
    %v433 = vsel %vm276, %v427, %v432
    %vm436 = vcmask 60416
    %v437 = vsel %vm436, %v430, 0.0
    %438 = vadd.xlane.f32.xlu0 %v437
    %v439 = vpop.xlane.xlu0 %438
    %v440 = vsel %vm436, %v433, 0.0
    %441 = vadd.xlane.f32.xlu0 %v440
    %v442 = vpop.xlane.xlu0 %441
    %v444 = vlaneseq
    %v445 = vshrl.u32 %v444, 7
    %v446 = vsub.s32 0, %v445
    %v447 = vrot.slane %v60, %v446
    %449 = vbcast.lane.b32.xlu0 %v447, 256
    %v450 = vpop.permute.xlu0 %449
    %v452 = vadd.f32 %v439, %v450
    %v453 = vadd.f32 %v442, %v450
    %v454 = vxor.u32 %v452, 2147483648
    %v455 = vxor.u32 %v453, 2147483648
    %v456 = vmul.f32 %v454, 1.442695
    %v457 = vpow.pop %v456
    %v458 = vmul.f32 %v455, 1.442695
    %v459 = vpow.pop %v458
    %v460 = vadd.f32 %v457, 1.0
    %v461 = vadd.f32 %v459, 1.0
    %v462 = vrcp.pop %v460
    %v463 = vmul.f32 1.0, %v462
    %v464 = vrcp.pop %v461
    %v465 = vmul.f32 1.0, %v464
    %467 = vset.pattern.permute.xlu0 0
    %468 = vperm.xlu0 %467, %v463
    %v469 = vpop.permute.xlu0 %468
    %471 = vset.pattern.permute.xlu0 0
    %472 = vperm.xlu0 %471, %v465
    %v473 = vpop.permute.xlu0 %472
    %v475 = vunpack.c.l.s4 839922192
    %v476 = vunpack.c.0.s8 %v475
    %v477 = vlaneseq
    %v478 = vshrl.u32 %v477, 7
    %v479 = vsub.s32 %v476, %v478
    %v480 = vrot.slane %v469, %v479
    %v482 = vunpack.c.l.s4 839922192
    %v483 = vunpack.c.0.s8 %v482
    %v484 = vlaneseq
    %v485 = vshrl.u32 %v484, 7
    %v486 = vsub.s32 %v483, %v485
    %v487 = vrot.slane %v473, %v486
    %v490 = vmul.f32 %v35, %v480
    %v491 = vmul.f32 %v36, %v487
    %492 = vst [vmem:[#allocation5] sm:$0xff] %v490
    %493 = vst [vmem:[#allocation5 + $0x8] sm:$0xff] %v491
    // Predicated region
    $region26: #{tpu_custom_call.1} parent=1 // pred_check
      _
    $region27: #{tpu_custom_call.1} parent=1 // pred_check_branch
      %495 = sbr.rel (0) target = $region29
    $region28: #{tpu_custom_call.1} parent=1 // pred_region
      %s497 = ssub.s32 256, 256
      %498 = vsyncadd [#allocation4], %s497
      %s499 = sshll.u32 [#allocation5], 4
      %s500 = int_to_ptr.vmem [resolvable:$true] %s499
      %505 = dma.vmem_to_hbm [thread:$0]  %s500, 256, %s5, [#allocation4], 128, 128, 8
    $region29: #{tpu_custom_call.1} parent=1 // pred_fallthru
      _
    // Predicated region
    $region30: #{tpu_custom_call.1} parent=1 // pred_check
      _
    $region31: #{tpu_custom_call.1} parent=1 // pred_check_branch
      %507 = sbr.rel (0) target = $region33
    $region32: #{tpu_custom_call.1} parent=1 // pred_region
      %508 = dma.done [#allocation4], 256
    $region33: #{tpu_custom_call.1} parent=1 // pred_fallthru
      _
    %509 = vsyncpa [#allocation3], 1
    %510 = vsyncpa [#allocation4], 1

</llo_original>
